<compile_context>
chip_gen: v7x
topology: tpu7x:2x2x1
jax: 0.10.0
libtpu: 0.0.40
codegen_flags: <defaults>
</compile_context>

<pallas_src>
import jax
import jax.numpy as jnp
from jax.experimental import pallas as pl
from jax.experimental.pallas import tpu as pltpu


_LANES = 128
_TARGET_TILE_ROWS = 2048   # 2048 rows x 128 lanes x 3 atoms x 4B = 3 MiB / buffer
_MIN_STEPS_PER_CORE = 2    # keep >= 2 grid steps per TC so DMA/compute overlap


def _round_up(x: int, m: int) -> int:
    return ((x + m - 1) // m) * m


def _num_tensorcores() -> int:
    """Best-effort TensorCore count of the default device (v7x = 2, else 1)."""
    try:
        kind = jax.devices()[0].device_kind.lower()
    except Exception:
        return 1
    return 2 if ("v7" in kind or "7x" in kind) else 1


def _make_formula_kernel(agg_p: float, tile_rows: int):
    """Per-tile error accumulation for Forall_b [(p AND q) -> r] with the
    p-mean-error aggregator.  Accumulates into a resident (8, 128) block."""
    groups = tile_rows // 8

    def formula_kernel(t_ref, o_ref):
        # Init the resident per-split accumulator on the first reduction step.
        @pl.when(pl.program_id(1) == 0)
        def _():
            o_ref[...] = jnp.zeros_like(o_ref)

        t = t_ref[...].astype(jnp.float32)     # (3, tr, 128), lane-dense batch
        p = t[0]                               # (tr, 128)
        q = t[1]
        r = t[2]

        # Product t-norm AND + Reichenbach implication:
        #   impl = 1 - p*q + p*q*r   =>   e = 1 - impl = p*q*(1 - r)
        e = p * q * (1.0 - r)

        if agg_p == 2.0:
            err = e * e                        # VPU mul, no EUP pow chain
        else:
            err = e ** agg_p                   # matches jnp reference; e >= 0

        # Fold tile rows down to 8 sublanes with pure vreg adds (no XLU
        # cross-sublane reduce); the accumulator store stays a full unmasked
        # (8, 128) vreg.
        o_ref[...] += jnp.sum(err.reshape(groups, 8, _LANES), axis=0)

    return formula_kernel


class Formula:
    """Concrete fuzzy-logic formula: Forall_b [(p AND q) -> r]."""

    def __init__(self, agg_p: float = 2.0):
        self.agg_p = float(agg_p)
        # jit so the wrapper relayout fuses into a single copy fusion feeding
        # the pallas_call (shapes are static, grid decided at trace time).
        self._jitted = jax.jit(self._forward_impl)

    def forward(self, truth_values: jax.Array) -> jax.Array:
        return self._jitted(truth_values)

    def _forward_impl(self, truth_values: jax.Array) -> jax.Array:
        B, A = truth_values.shape
        assert A >= 3, "formula needs at least 3 atom columns"

        dtype = truth_values.dtype
        itemsize = jnp.dtype(dtype).itemsize
        sub_mult = max(8, 32 // itemsize)      # sublane multiple per dtype

        # Lane-dense layout: only the 3 needed atom columns, batch on lanes.
        pqr = jnp.transpose(truth_values[:, :3])          # (3, B), input dtype

        rows = _round_up(pl.cdiv(B, _LANES), sub_mult)

        # Decide split and tile size jointly: split across TCs only when each
        # core gets >= _MIN_STEPS_PER_CORE steps, and cap the tile so the
        # split actually keeps that many steps per core.
        n_cores = _num_tensorcores()
        tr = min(_TARGET_TILE_ROWS, rows)
        n_splits = 1
        if n_cores > 1:
            per_core_rows = pl.cdiv(rows, n_cores)
            if per_core_rows >= _MIN_STEPS_PER_CORE * sub_mult:
                n_splits = n_cores
                cap = (per_core_rows // _MIN_STEPS_PER_CORE) // sub_mult * sub_mult
                tr = min(tr, max(sub_mult, cap))

        n_tiles = _round_up(pl.cdiv(rows, tr), n_splits)
        tiles_per_split = n_tiles // n_splits
        rows_p = n_tiles * tr
        Bp = rows_p * _LANES

        # Zero padding contributes zero error: p=q=r=0 -> e = 0 -> err = 0.
        # (This invariant is what makes the tail-pad correct; if the formula
        # changes, switch to an explicit tail mask.)
        pqr = jnp.pad(pqr, ((0, 0), (0, Bp - B)))
        pqr = pqr.reshape(3, rows_p, _LANES)

        kernel = _make_formula_kernel(self.agg_p, tr)
        cost = pl.CostEstimate(
            flops=6 * Bp,
            transcendentals=0 if self.agg_p == 2.0 else Bp,
            bytes_accessed=3 * Bp * itemsize + n_splits * 8 * _LANES * 4,
        )

        partials = pl.pallas_call(
            kernel,
            out_shape=jax.ShapeDtypeStruct((8, n_splits * _LANES), jnp.float32),
            grid=(n_splits, tiles_per_split),
            in_specs=[pl.BlockSpec(
                (3, tr, _LANES),
                lambda s, i, tps=tiles_per_split: (0, s * tps + i, 0))],
            out_specs=pl.BlockSpec((8, _LANES), lambda s, i: (0, s)),
            compiler_params=pltpu.CompilerParams(
                dimension_semantics=("parallel", "arbitrary")),
            cost_estimate=cost,
        )(pqr)

        # Tiny cross-split / cross-sublane / cross-lane combine + final root.
        mean_err = jnp.sum(partials) / jnp.float32(B)
        if self.agg_p == 2.0:
            root = jnp.sqrt(mean_err)
        else:
            root = mean_err ** (1.0 / self.agg_p)
        return (1.0 - root).reshape(1, 1)


class LTN:
    """JAX/Pallas port of the PyTorch LTN wrapper module."""

    def __init__(self, formula: Formula):
        self.formula = formula

    def forward(self, truth_values: jax.Array) -> jax.Array:
        return self.formula.forward(truth_values)

    def __call__(self, truth_values: jax.Array) -> jax.Array:
        return self.forward(truth_values)


def _reference_forward(truth_values, agg_p=2.0):
    """Pure-jnp reference for correctness checking."""
    t = truth_values.astype(jnp.float32)
    p, q, r = t[:, 0], t[:, 1], t[:, 2]
    conj = p * q
    impl = 1.0 - conj + conj * r
    err = (1.0 - impl) ** agg_p
    return (1.0 - jnp.mean(err) ** (1.0 / agg_p)).reshape(1, 1)


if __name__ == "__main__":
    key = jax.random.PRNGKey(0)
    batch, atoms = 8, 4
    truth_values = jax.random.uniform(key, (batch, atoms), dtype=jnp.float32)

    model = LTN(Formula(agg_p=2.0))
    out = jax.block_until_ready(model(truth_values))
    ref = _reference_forward(truth_values, 2.0)
    assert out.shape == (1, 1)
    assert jnp.allclose(out, ref, atol=1e-5, rtol=1e-5), (out, ref)

    # Larger case exercising the tiled multi-step (and, on v7x, split)
    # streaming-reduction path.
    big = jax.random.uniform(jax.random.PRNGKey(1), (300_000, 4),
                             dtype=jnp.float32)
    out_big = jax.block_until_ready(model(big))
    ref_big = _reference_forward(big, 2.0)
    assert jnp.allclose(out_big, ref_big, atol=1e-4, rtol=1e-4), (out_big, ref_big)

    print("KERNEL_OK")
</pallas_src>

<mosaic_0001>
module attributes {stable_mosaic.version = 11 : i64} {
  func.func @formula_kernel(%arg0: i32, %arg1: i32, %arg2: memref<3x8x128xf32, #tpu.memory_space<vmem>>, %arg3: memref<8x128xf32, #tpu.memory_space<vmem>>) attributes {dimension_semantics = [#tpu.dimension_semantics<parallel>, #tpu.dimension_semantics<arbitrary>], iteration_bounds = array<i64: 1, 1>, scalar_prefetch = 0 : i64, scratch_operands = 0 : i64, tpu.core_type = #tpu.core_type<tc>, window_params = [{transform_indices = @transform_0, window_bounds = array<i64: 3, 8, 128>}, {transform_indices = @transform_1, window_bounds = array<i64: 8, 128>}]} {
    %c0_i32 = arith.constant 0 : i32
    %0 = arith.cmpi eq, %arg1, %c0_i32 : i32
    %1 = arith.extui %0 : i1 to i32
    %c0_i32_0 = arith.constant 0 : i32
    %2 = arith.cmpi ne, %1, %c0_i32_0 : i32
    scf.if %2 {
      %cst_8 = arith.constant 0.000000e+00 : f32
      %20 = vector.broadcast %cst_8 : f32 to vector<8x128xf32>
      %c0_9 = arith.constant 0 : index
      %c0_10 = arith.constant 0 : index
      %21 = vector.load %arg3[%c0_9, %c0_10] : memref<8x128xf32, #tpu.memory_space<vmem>>, vector<8x128xf32>
      tpu.vector_store %arg3[%c0_9, %c0_10], %20 {strides = array<i32>} : memref<8x128xf32, #tpu.memory_space<vmem>>, vector<8x128xf32>,
    } else {
    }
    %c0 = arith.constant 0 : index
    %c0_1 = arith.constant 0 : index
    %c0_2 = arith.constant 0 : index
    %3 = vector.load %arg2[%c0, %c0_1, %c0_2] : memref<3x8x128xf32, #tpu.memory_space<vmem>>, vector<3x8x128xf32>
    %4 = vector.extract_strided_slice %3 {offsets = [0, 0, 0], sizes = [1, 8, 128], strides = [1, 1, 1]} : vector<3x8x128xf32> to vector<1x8x128xf32>
    %5 = vector.shape_cast %4 : vector<1x8x128xf32> to vector<8x128xf32>
    %6 = vector.extract_strided_slice %3 {offsets = [1, 0, 0], sizes = [1, 8, 128], strides = [1, 1, 1]} : vector<3x8x128xf32> to vector<1x8x128xf32>
    %7 = vector.shape_cast %6 : vector<1x8x128xf32> to vector<8x128xf32>
    %8 = vector.extract_strided_slice %3 {offsets = [2, 0, 0], sizes = [1, 8, 128], strides = [1, 1, 1]} : vector<3x8x128xf32> to vector<1x8x128xf32>
    %9 = vector.shape_cast %8 : vector<1x8x128xf32> to vector<8x128xf32>
    %10 = arith.mulf %5, %7 : vector<8x128xf32>
    %cst = arith.constant 1.000000e+00 : f32
    %11 = vector.broadcast %cst : f32 to vector<8x128xf32>
    %12 = arith.subf %11, %9 : vector<8x128xf32>
    %13 = arith.mulf %10, %12 : vector<8x128xf32>
    %14 = arith.mulf %13, %13 : vector<8x128xf32>
    %c0_3 = arith.constant 0 : index
    %c0_4 = arith.constant 0 : index
    %15 = vector.load %arg3[%c0_3, %c0_4] : memref<8x128xf32, #tpu.memory_space<vmem>>, vector<8x128xf32>
    %16 = vector.shape_cast %14 : vector<8x128xf32> to vector<1x8x128xf32>
    %cst_5 = arith.constant dense<0.000000e+00> : vector<8x128xf32>
    %17 = vector.multi_reduction <add>, %16, %cst_5 [0] : vector<1x8x128xf32> to vector<8x128xf32>
    %18 = arith.addf %15, %17 : vector<8x128xf32>
    %c0_6 = arith.constant 0 : index
    %c0_7 = arith.constant 0 : index
    %19 = vector.load %arg3[%c0_6, %c0_7] : memref<8x128xf32, #tpu.memory_space<vmem>>, vector<8x128xf32>
    tpu.vector_store %arg3[%c0_6, %c0_7], %18 {strides = array<i32>} : memref<8x128xf32, #tpu.memory_space<vmem>>, vector<8x128xf32>,
    return
  }
  func.func @transform_0(%arg0: i32, %arg1: i32) -> (i32, i32, i32) {
    %c1_i32 = arith.constant 1 : i32
    %0 = arith.muli %arg0, %c1_i32 : i32
    %1 = arith.addi %0, %arg1 : i32
    %c0_i32 = arith.constant 0 : i32
    %c0_i32_0 = arith.constant 0 : i32
    %c0_i32_1 = arith.constant 0 : i32
    return %c0_i32, %1, %c0_i32_0 : i32, i32, i32
  }
  func.func @transform_1(%arg0: i32, %arg1: i32) -> (i32, i32) {
    %c0_i32 = arith.constant 0 : i32
    %c0_i32_0 = arith.constant 0 : i32
    return %c0_i32, %arg0 : i32, i32
  }
}

</mosaic_0001>

<llo_original>
// kernel: _forward_impl.1
$region0: #{_forward_impl.1}
  #allocation0 [shape = 'u32[]', space=smem, size = 0x4, offset = 0x4, fixed_abs, tag = 'smem constant byte address 0x4 - core index']
  #allocation1 [shape = 'u32[144,128]{1,0:T(1,128)}', space=vmem, size = 0x12000, scoped, tag = 'internal scratch']
  %s0 = inlined_call_operand.vmem [shape: f32[3,8,128], index: 0, kind: input, shape index: {}]
  %s1 = inlined_call_operand.vmem [shape: f32[8,128], index: 1, kind: output, shape index: {}]
  %s2 = sld [smem:[#allocation0]]
  $region18: #{_forward_impl.1} parent=0
    _
  %s4 = ssub.s32 1, %s2
  %s5 = scalar_select 0, %s4, %s2
  // Predicated region
  $region2: #{_forward_impl.1} parent=0 // pred_check
    _
  $region3: #{_forward_impl.1} parent=0 // pred_check_branch
    %7 = sbr.rel (0) target = $region5
  $region4: #{_forward_impl.1} parent=0 // pred_region
    %s8 = sadd.s32 0, 0
    %p9 = scmp.lt.s32.totalorder %s8, 0
    %s10 = scalar_select %p9, %s8, 0
    %s11 = smul.addr %s10, 8
    %s12 = scalar_lea.vmem %s0, %s11
    %s13 = sadd.s32 0, 0
  $region5: #{_forward_impl.1} parent=0 // pred_fallthru
    _
  %s14 = sadd.s32 0, 0
  %p15 = scmp.lt.s32.totalorder %s14, 0
  %s16 = scalar_select %p15, %s14, 0
  %s17 = smul.addr %s16, 8
  %s18 = scalar_lea.vmem %s0, %s17
  %s19 = sadd.s32 0, 0
  %p20 = scmp.lt.s32.totalorder %s19, 0
  %s21 = scalar_select %p20, %s19, 0
  %s22 = smul.addr %s21, 8
  %s23 = scalar_lea.vmem %s0, %s22
  %s24 = sadd.s32 0, 0
  %p25 = scmp.eq.s32.totalorder 0, 0
  // Predicated region
  $region6: #{_forward_impl.1} parent=0 // pred_check
    %p26 = pneg %p25
  $region7: #{_forward_impl.1} parent=0 // pred_check_branch
    %28 = sbr.rel (%p26) target = $region9
  $region8: #{_forward_impl.1} parent=0 // pred_region
    %29 = vst [vmem:[%s1] sm:$0xff] 0.0
  $region9: #{_forward_impl.1} parent=0 // pred_fallthru
    _
  %v30 = vld [vmem:[%s23] sm:$0xff]
  %v31 = vld [vmem:[%s23 + $0x8] sm:$0xff]
  %v32 = vld [vmem:[%s23 + $0x10] sm:$0xff]
  %v33 = vmul.f32 %v30, %v31
  %v34 = vsub.f32 1.0, %v32
  %v35 = vmul.f32 %v33, %v34
  %v36 = vmul.f32 %v35, %v35
  %v37 = vld [vmem:[%s1] sm:$0xff]
  %v38 = vadd.f32 %v36, 0.0
  %v39 = vadd.f32 %v37, %v38
  %40 = vst [vmem:[%s1] sm:$0xff] %v39
  // Predicated region
  $region10: #{_forward_impl.1} parent=0 // pred_check
    _
  $region11: #{_forward_impl.1} parent=0 // pred_check_branch
    %42 = sbr.rel (0) target = $region13
  $region12: #{_forward_impl.1} parent=0 // pred_region
    _
  $region13: #{_forward_impl.1} parent=0 // pred_fallthru
    _
  // Predicated region
  $region14: #{_forward_impl.1} parent=0 // pred_check
    _
  $region15: #{_forward_impl.1} parent=0 // pred_check_branch
    %44 = sbr.rel (0) target = $region17
  $region16: #{_forward_impl.1} parent=0 // pred_region
    _
  $region17: #{_forward_impl.1} parent=0 // pred_fallthru
    _

</llo_original>
